<compile_context>
chip_gen: v5e
topology: v5e:2x2
jax: 0.10.0
libtpu: 0.0.40
codegen_flags: <defaults>
</compile_context>

<pallas_src>
import functools

import numpy as np
import jax
import jax.numpy as jnp
from jax.experimental import pallas as pl
from jax.experimental.pallas import tpu as pltpu


def _round_up(x, m):
    return (x + m - 1) // m * m


# ----------------------------------------------------------------------------
# Pallas kernel: one M-tile of  y = x @ W + b   (nn.Linear input_word_proj)
# x/W arrive in bf16 (MXU-native); accumulation and bias add are f32; the store
# dtype is whatever the output ref was declared as (f32 default, bf16 optional).
# ----------------------------------------------------------------------------
def _linear_bias_kernel(x_ref, w_ref, b_ref, y_ref):
    acc = jnp.dot(x_ref[...], w_ref[...], preferred_element_type=jnp.float32)
    y_ref[...] = (acc + b_ref[...]).astype(y_ref.dtype)


def linear_proj_pallas(x, w, b, *, tile_m=None, min_pallas_rows=256,
                       out_dtype=jnp.float32):
    """y = x @ w + b.  x: (M, D), w: (D, H), b: (H,).  Returns (M, H) in out_dtype.

    - M is tiled (1-D grid over rows, "parallel") so x reads / y writes double-buffer
      behind the MXU and the grid can shard across v7x's two TensorCores.
    - D and H are zero-padded to multiples of 128 *only when needed* (full MXU tiles,
      lane-dense unmasked output stores); production BERT/hidden dims skip the pad.
    - bf16 MXU inputs, f32 accumulate/bias; configurable store dtype.
    """
    M, D = x.shape
    H = w.shape[1]

    xb = x if x.dtype == jnp.bfloat16 else x.astype(jnp.bfloat16)
    wb = w if w.dtype == jnp.bfloat16 else w.astype(jnp.bfloat16)

    if M <= min_pallas_rows:
        # Tiny-M fallback: per-call + ~0.35 us/step grid overhead and <128-row MXU
        # occupancy dominate there; XLA's fused matmul wins.
        acc = jnp.dot(xb, wb, preferred_element_type=jnp.float32)
        return (acc + b.astype(jnp.float32)[None, :]).astype(out_dtype)

    Mp = _round_up(M, 8)
    Dp = _round_up(D, 128)
    Hp = _round_up(H, 128)
    out_isz = np.dtype(out_dtype).itemsize

    # Conditional padding: no-ops for the common production shapes.
    if (Mp, Dp) != (M, D):
        xb = jnp.pad(xb, ((0, Mp - M), (0, Dp - D)))
    if (Dp, Hp) != (D, H):
        wb = jnp.pad(wb, ((0, Dp - D), (0, Hp - H)))
    bp = b.reshape(1, -1).astype(jnp.float32)
    if Hp != H:
        bp = jnp.pad(bp, ((0, 0), (0, Hp - H)))

    if tile_m is None:
        # >=2 grid steps whenever M allows (keeps both v7x TensorCores busy), capped
        # at 1024 rows (mem-bound roofline plateaus ~1024 on v5e/v6e, fewer per-step
        # overheads than 512).
        tile_m = min(1024, _round_up(pl.cdiv(Mp, 2), 8))
    # Never drop below 128 MXU rows unless the whole problem is smaller than that.
    tile_m = int(min(max(_round_up(tile_m, 8), min(128, Mp)), Mp))
    grid = (pl.cdiv(Mp, tile_m),)

    # Double-buffered x/y tiles + resident weight/bias, with slack.
    vmem_bytes = (2 * tile_m * Dp * 2 + 2 * Dp * Hp * 2
                  + 2 * tile_m * Hp * out_isz + 2 * Hp * 4)
    try:
        vmem_cap = int(pltpu.get_tpu_info().vmem_capacity_bytes)
    except Exception:
        vmem_cap = 64 << 20   # conservative (v7x per-TC VMEM)
    vmem_limit = int(min(max(2 * vmem_bytes, 8 << 20),
                         max(vmem_cap // 2, vmem_bytes)))

    # TODO(synk): profile-guided pipeline_mode tweaks (pl.Buffered(1) on the resident
    # w/b specs, pl.Buffered(3) on x at tile_m>=1024 on v7x) if xprof shows exposed DMA.
    y = pl.pallas_call(
        _linear_bias_kernel,
        out_shape=jax.ShapeDtypeStruct((Mp, Hp), out_dtype),
        grid=grid,
        in_specs=[
            pl.BlockSpec((tile_m, Dp), lambda i: (i, 0)),
            pl.BlockSpec((Dp, Hp), lambda i: (0, 0)),   # weight resident across steps
            pl.BlockSpec((1, Hp), lambda i: (0, 0)),    # bias resident across steps
        ],
        out_specs=pl.BlockSpec((tile_m, Hp), lambda i: (i, 0)),
        compiler_params=pltpu.CompilerParams(
            dimension_semantics=("parallel",),
            vmem_limit_bytes=vmem_limit,
        ),
        cost_estimate=pl.CostEstimate(
            flops=2 * Mp * Dp * Hp,
            transcendentals=0,
            bytes_accessed=Mp * Dp * 2 + Dp * Hp * 2 + Hp * 4 + Mp * Hp * out_isz,
        ),
    )(xb, wb, bp)

    if (Mp, Hp) != (M, H):
        y = y[:M, :H]
    return y


# ----------------------------------------------------------------------------
# Module wrapper reproducing LanEncoder.forward (pretrained-lfeat path)
# ----------------------------------------------------------------------------
def init_params(key, num_queries, vocab_size, hidden_dim, bert_dim):
    k1, k2, k3, k4 = jax.random.split(key, 4)
    return {
        # nn.Linear(bert_dim, hidden_dim): stored as (bert_dim, hidden_dim) == W.T
        "w": (jax.random.normal(k1, (bert_dim, hidden_dim), jnp.float32)
              / np.sqrt(bert_dim)).astype(jnp.float32),
        "b": jax.random.normal(k2, (hidden_dim,), jnp.float32) * 0.01,
        # nn.Embedding(num_queries, hidden_dim)  (query_pos_embed)
        "pos_table": jax.random.normal(k3, (num_queries, hidden_dim), jnp.float32),
        # nn.Embedding(vocab_size, hidden_dim) — defined in __init__, unused on this path
        "query_embed": jax.random.normal(k4, (vocab_size, hidden_dim), jnp.float32),
    }


@functools.partial(jax.jit, static_argnames=("num_queries", "tile_m",
                                             "min_pallas_rows", "out_dtype"))
def lan_encoder_forward_padded(params, sent, sent_mask, *, num_queries,
                               tile_m=None, min_pallas_rows=256,
                               out_dtype=jnp.float32):
    """Static-shape forward (compiles once per input shape, no host sync).

    Returns lan_feat / query_pos padded along the query axis to NQ=min(num_queries, L),
    the per-example token mask (True = padded; padded query slots flagged True) and
    n_valid.  NOTE: rows past n_valid are derived from column 0 (keep_idx fill value)
    — consumers of the padded API must mask with query_mask / n_valid.
    """
    bsz, L, dim = sent.shape
    H = params["w"].shape[1]
    NQ = min(num_queries, L)

    # Columns not padded in every example; first NQ of them, original order preserved
    # (matches `input_word_ids[msk].view(bsz,-1,dim)[:, :num_queries]`).
    m = sent_mask.sum(axis=0) != bsz                                  # (L,) bool
    keep_idx = jnp.nonzero(m, size=NQ, fill_value=0)[0]               # (NQ,) static shape
    n_valid = jnp.minimum(jnp.count_nonzero(m), NQ).astype(jnp.int32)

    # Cast to bf16 BEFORE the gather: every subsequent HBM pass (gather, reshape,
    # conditional pad, kernel x-read) moves half the bytes.
    sent_bf = sent.astype(jnp.bfloat16)
    x_sel = jnp.take(sent_bf, keep_idx, axis=1)                       # (bsz, NQ, D) bf16
    # Matmul in natural (bsz*NQ, D) row order — no D-wide input transpose; the much
    # cheaper H-wide transpose is applied to the kernel output below.
    x_rows = x_sel.reshape(bsz * NQ, dim)

    y = linear_proj_pallas(x_rows, params["w"], params["b"], tile_m=tile_m,
                           min_pallas_rows=min_pallas_rows,
                           out_dtype=out_dtype)                       # (bsz*NQ, H)
    lan_feat = jnp.transpose(y.reshape(bsz, NQ, H), (1, 0, 2))        # (NQ, bsz, H)

    # query_pos_embed(arange(NQ)) broadcast over batch: pure table slice, no kernel.
    query_pos = jnp.broadcast_to(params["pos_table"][:NQ][:, None, :], (NQ, bsz, H))

    # per-example mask on kept columns; padded query slots marked as padded (True).
    slot_valid = jnp.arange(NQ) < n_valid
    query_mask = jnp.take(sent_mask, keep_idx, axis=1).astype(bool)   # (bsz, NQ)
    query_mask = jnp.where(slot_valid[None, :], query_mask, True)

    return lan_feat, query_pos, query_mask, n_valid


def lan_encoder_forward(params, sent, sent_mask, num_queries, *, tile_m=None,
                        min_pallas_rows=256, out_dtype=jnp.float32):
    """Matches LanEncoder.forward (use_pretrained_lfeat=True, learn_query_pos_embedding=True).

    Returns (lan_feat, query_pos_embedding), each (Lq, bsz, hidden_dim) with
    Lq = min(#columns not padded everywhere, num_queries).  The heavy compute runs at
    static (num_queries-padded) shapes; only this final truncation reads one scalar
    back to the host.  When embedding this module in a larger jitted graph, call
    lan_encoder_forward_padded directly and mask with query_mask / n_valid instead.
    """
    lan_p, pos_p, _, n_valid = lan_encoder_forward_padded(
        params, sent, sent_mask, num_queries=num_queries, tile_m=tile_m,
        min_pallas_rows=min_pallas_rows, out_dtype=out_dtype)
    Lq = int(n_valid)          # tiny scalar sync; kernel shapes stay static
    return lan_p[:Lq], pos_p[:Lq]


# ----------------------------------------------------------------------------
# Demo / smoke test
# ----------------------------------------------------------------------------
if __name__ == "__main__":
    bsz, L = 2, 16
    bert_dim, hidden_dim = 64, 32
    num_queries, vocab_size = 8, 100

    key = jax.random.PRNGKey(0)
    k_param, k_sent = jax.random.split(key)
    params = init_params(k_param, num_queries, vocab_size, hidden_dim, bert_dim)

    sent = jax.random.normal(k_sent, (bsz, L, bert_dim), jnp.float32)
    # mask: 1 = padded. Last 4 columns padded in ALL examples -> dropped by the
    # `sum(dim=0) != bsz` selection; columns padded in only one example are kept.
    sent_mask_np = np.zeros((bsz, L), dtype=np.int32)
    sent_mask_np[:, 12:] = 1     # padded everywhere -> removed
    sent_mask_np[1, 10:12] = 1   # padded only in example 1 -> kept
    sent_mask = jnp.asarray(sent_mask_np)

    # min_pallas_rows=0 forces the Pallas path at this toy size (production sizes take
    # it automatically; tiny M would otherwise use the XLA-fused fallback).
    lan_feat, query_pos = lan_encoder_forward(params, sent, sent_mask, num_queries,
                                              min_pallas_rows=0)
    jax.block_until_ready((lan_feat, query_pos))

    # ---- reference (same semantics as the PyTorch module) ----
    keep_np = np.nonzero(sent_mask_np.sum(0) != bsz)[0][:num_queries]
    Lq = int(keep_np.shape[0])
    x_sel = jnp.take(sent, jnp.asarray(keep_np, jnp.int32), axis=1)    # (bsz, Lq, D)

    # bf16-matched reference (kernel multiplies in bf16, accumulates in f32)
    ref_bf = jnp.einsum("bld,dh->blh",
                        x_sel.astype(jnp.bfloat16), params["w"].astype(jnp.bfloat16),
                        preferred_element_type=jnp.float32) + params["b"][None, None, :]
    ref_lan_bf = jnp.transpose(ref_bf, (1, 0, 2))
    # full-f32 reference (module numerics)
    ref_f32 = jnp.einsum("bld,dh->blh", x_sel, params["w"]) + params["b"][None, None, :]
    ref_lan_f32 = jnp.transpose(ref_f32, (1, 0, 2))
    ref_pos = jnp.broadcast_to(params["pos_table"][:Lq][:, None, :],
                               (Lq, bsz, hidden_dim))

    assert lan_feat.shape == (Lq, bsz, hidden_dim), lan_feat.shape
    assert query_pos.shape == (Lq, bsz, hidden_dim), query_pos.shape
    np.testing.assert_allclose(np.asarray(lan_feat), np.asarray(ref_lan_bf),
                               rtol=1e-4, atol=1e-4)
    np.testing.assert_allclose(np.asarray(lan_feat), np.asarray(ref_lan_f32),
                               rtol=5e-2, atol=5e-2)
    np.testing.assert_allclose(np.asarray(query_pos), np.asarray(ref_pos),
                               rtol=0, atol=0)

    print("KERNEL_OK")
</pallas_src>

<mosaic_0001>
module attributes {stable_mosaic.version = 11 : i64} {
  func.func @_linear_bias_kernel(%arg0: i32, %arg1: memref<16x128xbf16, #tpu.memory_space<vmem>>, %arg2: memref<128x128xbf16, #tpu.memory_space<vmem>>, %arg3: memref<1x128xf32, #tpu.memory_space<vmem>>, %arg4: memref<16x128xf32, #tpu.memory_space<vmem>>) attributes {dimension_semantics = [#tpu.dimension_semantics<parallel>], iteration_bounds = array<i64: 1>, scalar_prefetch = 0 : i64, scratch_operands = 0 : i64, tpu.core_type = #tpu.core_type<tc>, window_params = [{transform_indices = @transform_0, window_bounds = array<i64: 16, 128>}, {pipeline_mode = #tpu.pipeline_mode<synchronous>, transform_indices = @transform_1, window_bounds = array<i64: 128, 128>}, {pipeline_mode = #tpu.pipeline_mode<synchronous>, transform_indices = @transform_2, window_bounds = array<i64: 1, 128>}, {transform_indices = @transform_3, window_bounds = array<i64: 16, 128>}]} {
    %c0 = arith.constant 0 : index
    %c0_0 = arith.constant 0 : index
    %0 = vector.load %arg1[%c0, %c0_0] : memref<16x128xbf16, #tpu.memory_space<vmem>>, vector<16x128xbf16>
    %c0_1 = arith.constant 0 : index
    %c0_2 = arith.constant 0 : index
    %1 = vector.load %arg2[%c0_1, %c0_2] : memref<128x128xbf16, #tpu.memory_space<vmem>>, vector<128x128xbf16>
    %cst = arith.constant dense<0.000000e+00> : vector<16x128xf32>
    %2 = tpu.matmul %0, %1, %cst {dimension_numbers = #tpu.dot_dimension_numbers<[1], [0], [0], [1], [0, 0, 1, 1], [], []>} : vector<16x128xbf16>, vector<128x128xbf16>, vector<16x128xf32> -> vector<16x128xf32>
    %c0_3 = arith.constant 0 : index
    %c0_4 = arith.constant 0 : index
    %3 = vector.load %arg3[%c0_3, %c0_4] : memref<1x128xf32, #tpu.memory_space<vmem>>, vector<1x128xf32>
    %4 = vector.broadcast %3 : vector<1x128xf32> to vector<16x128xf32>
    %5 = arith.addf %2, %4 : vector<16x128xf32>
    %c0_5 = arith.constant 0 : index
    %c0_6 = arith.constant 0 : index
    %6 = vector.load %arg4[%c0_5, %c0_6] : memref<16x128xf32, #tpu.memory_space<vmem>>, vector<16x128xf32>
    tpu.vector_store %arg4[%c0_5, %c0_6], %5 {strides = array<i32>} : memref<16x128xf32, #tpu.memory_space<vmem>>, vector<16x128xf32>,
    return
  }
  func.func @transform_0(%arg0: i32) -> (i32, i32) {
    %c0_i32 = arith.constant 0 : i32
    %c0_i32_0 = arith.constant 0 : i32
    return %arg0, %c0_i32 : i32, i32
  }
  func.func @transform_1(%arg0: i32) -> (i32, i32) {
    %c0_i32 = arith.constant 0 : i32
    %c0_i32_0 = arith.constant 0 : i32
    %c0_i32_1 = arith.constant 0 : i32
    return %c0_i32, %c0_i32_0 : i32, i32
  }
  func.func @transform_2(%arg0: i32) -> (i32, i32) {
    %c0_i32 = arith.constant 0 : i32
    %c0_i32_0 = arith.constant 0 : i32
    %c0_i32_1 = arith.constant 0 : i32
    return %c0_i32, %c0_i32_0 : i32, i32
  }
  func.func @transform_3(%arg0: i32) -> (i32, i32) {
    %c0_i32 = arith.constant 0 : i32
    %c0_i32_0 = arith.constant 0 : i32
    return %arg0, %c0_i32 : i32, i32
  }
}

</mosaic_0001>

<llo_original>
// kernel: lan_encoder_forward_padded.1
$region0: #{lan_encoder_forward_padded.1}
  #allocation0 [shape = 'u32[]', space=smem, size = 0x4, offset = 0x4, fixed_abs, tag = 'smem constant byte address 0x4 - core index']
  #allocation1 [shape = 'u32[72,128]{1,0:T(1,128)}', space=vmem, size = 0x9000, scoped, tag = 'internal scratch']
  %s0 = inlined_call_operand.vmem [shape: bf16[16,128], index: 0, kind: input, shape index: {}]
  %s1 = inlined_call_operand.vmem [shape: bf16[128,128], index: 1, kind: input, shape index: {}]
  %s2 = inlined_call_operand.vmem [shape: f32[1,128], index: 2, kind: input, shape index: {}]
  %s3 = inlined_call_operand.vmem [shape: f32[16,128], index: 3, kind: output, shape index: {}]
  %s4 = sld [smem:[#allocation0]]
  $region22: #{lan_encoder_forward_padded.1} parent=0
    _
  %s6 = ssub.s32 1, %s4
  %s7 = scalar_select 0, %s6, %s4
  // Predicated region
  $region2: #{lan_encoder_forward_padded.1} parent=0 // pred_check
    _
  $region3: #{lan_encoder_forward_padded.1} parent=0 // pred_check_branch
    %9 = sbr.rel (0) target = $region5
  $region4: #{lan_encoder_forward_padded.1} parent=0 // pred_region
    _
  $region5: #{lan_encoder_forward_padded.1} parent=0 // pred_fallthru
    _
  // Predicated region
  $region6: #{lan_encoder_forward_padded.1} parent=0 // pred_check
    _
  $region7: #{lan_encoder_forward_padded.1} parent=0 // pred_check_branch
    %11 = sbr.rel (0) target = $region9
  $region8: #{lan_encoder_forward_padded.1} parent=0 // pred_region
    _
  $region9: #{lan_encoder_forward_padded.1} parent=0 // pred_fallthru
    _
  // Predicated region
  $region10: #{lan_encoder_forward_padded.1} parent=0 // pred_check
    _
  $region11: #{lan_encoder_forward_padded.1} parent=0 // pred_check_branch
    %13 = sbr.rel (0) target = $region13
  $region12: #{lan_encoder_forward_padded.1} parent=0 // pred_region
    _
  $region13: #{lan_encoder_forward_padded.1} parent=0 // pred_fallthru
    _
  %v14 = vld [vmem:[%s0] sm:$0xf]
  %v15 = vld [vmem:[%s0 + $0x4] sm:$0xf]
  %v16 = vld [vmem:[%s1] sm:$0xf]
  %v17 = vld [vmem:[%s1 + $0x4] sm:$0xf]
  %v18 = vld [vmem:[%s1 + $0x8] sm:$0xf]
  %v19 = vld [vmem:[%s1 + $0xc] sm:$0xf]
  %v20 = vld [vmem:[%s1 + $0x10] sm:$0xf]
  %v21 = vld [vmem:[%s1 + $0x14] sm:$0xf]
  %v22 = vld [vmem:[%s1 + $0x18] sm:$0xf]
  %v23 = vld [vmem:[%s1 + $0x1c] sm:$0xf]
  %v24 = vld [vmem:[%s1 + $0x20] sm:$0xf]
  %v25 = vld [vmem:[%s1 + $0x24] sm:$0xf]
  %v26 = vld [vmem:[%s1 + $0x28] sm:$0xf]
  %v27 = vld [vmem:[%s1 + $0x2c] sm:$0xf]
  %v28 = vld [vmem:[%s1 + $0x30] sm:$0xf]
  %v29 = vld [vmem:[%s1 + $0x34] sm:$0xf]
  %v30 = vld [vmem:[%s1 + $0x38] sm:$0xf]
  %v31 = vld [vmem:[%s1 + $0x3c] sm:$0xf]
  %v32 = vld [vmem:[%s2] sm:$0x1]
  %v34 = vperm.slane %v32, 0
  %v38 = vunpack.c.l.b16 %v14
  %v39 = vunpack.c.l.b16 %v15
  %v40 = vpack.c.b16 %v39, %v38
  %v58 = vunpack.c.l.b16 %v16
  %v59 = vunpack.c.l.b16 %v17
  %v60 = vunpack.c.l.b16 %v18
  %v61 = vunpack.c.l.b16 %v19
  %v62 = vunpack.c.l.b16 %v20
  %v63 = vunpack.c.l.b16 %v21
  %v64 = vunpack.c.l.b16 %v22
  %v65 = vunpack.c.l.b16 %v23
  %v66 = vunpack.c.l.b16 %v24
  %v67 = vunpack.c.l.b16 %v25
  %v68 = vunpack.c.l.b16 %v26
  %v69 = vunpack.c.l.b16 %v27
  %v70 = vunpack.c.l.b16 %v28
  %v71 = vunpack.c.l.b16 %v29
  %v72 = vunpack.c.l.b16 %v30
  %v73 = vunpack.c.l.b16 %v31
  %v74 = vpack.c.b16 %v59, %v58
  %v75 = vpack.c.b16 %v61, %v60
  %v76 = vpack.c.b16 %v63, %v62
  %v77 = vpack.c.b16 %v65, %v64
  %v78 = vpack.c.b16 %v67, %v66
  %v79 = vpack.c.b16 %v69, %v68
  %v80 = vpack.c.b16 %v71, %v70
  %v81 = vpack.c.b16 %v73, %v72
  %90 = vmatpush.bf16.msra.mxu0 %v81
  %91 = vmatpush.bf16.msra.mxu0 %v80
  %92 = vmatpush.bf16.msra.mxu0 %v79
  %93 = vmatpush.bf16.msra.mxu0 %v78
  %94 = vmatpush.bf16.msra.mxu0 %v77
  %95 = vmatpush.bf16.msra.mxu0 %v76
  %96 = vmatpush.bf16.msra.mxu0 %v75
  %97 = vmatpush.bf16.msra.mxu0 %v74
  %98 = vmatmul.bf16.gmra.mxu0 %v40
  %v99 = vpop.f32.mrf.mxu0
  %v100 = vadd.f32 %v34, %v99
  %v101 = vpop.f32.mrf.mxu0
  %v102 = vadd.f32 %v34, %v101
  %103 = vdwg.mxu0
  %104 = vst [vmem:[%s3] sm:$0xff] %v100
  %105 = vst [vmem:[%s3 + $0x8] sm:$0xff] %v102
  // Predicated region
  $region14: #{lan_encoder_forward_padded.1} parent=0 // pred_check
    _
  $region15: #{lan_encoder_forward_padded.1} parent=0 // pred_check_branch
    %107 = sbr.rel (0) target = $region17
  $region16: #{lan_encoder_forward_padded.1} parent=0 // pred_region
    _
  $region17: #{lan_encoder_forward_padded.1} parent=0 // pred_fallthru
    _
  // Predicated region
  $region18: #{lan_encoder_forward_padded.1} parent=0 // pred_check
    _
  $region19: #{lan_encoder_forward_padded.1} parent=0 // pred_check_branch
    %109 = sbr.rel (0) target = $region21
  $region20: #{lan_encoder_forward_padded.1} parent=0 // pred_region
    _
  $region21: #{lan_encoder_forward_padded.1} parent=0 // pred_fallthru
    _

</llo_original>
